<compile_context>
chip_gen: v6e
topology: v6e:2x2x1
jax: 0.10.0
libtpu: 0.0.40
codegen_flags: <defaults>
</compile_context>

<pallas_src>
import functools

import jax
import jax.numpy as jnp
from jax.experimental import pallas as pl
from jax.experimental.pallas import tpu as pltpu

GAMMA = 2
ALPHA = 0.95

LANES = 128
MAX_TILE_ROWS = 1024      # 1024x128 f32 = 512 KiB per input buffer
PAD_LOGIT = 30.0          # sigmoid(30) == 1.0 in f32 -> exact 0 loss with target=1


def _cdiv(a, b):
    return -(-a // b)


def _focal_loss_kernel(p_ref, t_ref, out_ref, acc_ref, *, gamma, alpha):
    i = pl.program_id(1)

    @pl.when(i == 0)
    def _():
        acc_ref[...] = jnp.zeros_like(acc_ref)

    x = p_ref[...].astype(jnp.float32)
    t = t_ref[...].astype(jnp.float32)

    # Stable sigmoid / log-sigmoid sharing one exp and one log:
    #   e = exp(-|x|)
    #   log(sigmoid(x))  = min(x, 0)  - log(1 + e)
    #   log(sigmoid(-x)) = min(-x, 0) - log(1 + e)     (== log(1 - pt))
    #   sigmoid(x)       = 1/(1+e)  if x >= 0  else  e/(1+e)
    e = jnp.exp(-jnp.abs(x))
    one_p_e = 1.0 + e
    lse = jnp.log(one_p_e)
    log_pt = jnp.minimum(x, 0.0) - lse
    log_1mpt = jnp.minimum(-x, 0.0) - lse
    inv = 1.0 / one_p_e
    pt = jnp.where(x >= 0.0, inv, e * inv)
    one_m_pt = 1.0 - pt

    if gamma == 2:                      # integer special-case: VALU squares,
        w_pos = jnp.square(one_m_pt)    # not exp/log-based pow on the EUP
        w_neg = jnp.square(pt)
    else:
        w_pos = one_m_pt ** gamma
        w_neg = pt ** gamma

    loss = ((-alpha) * w_pos * t * log_pt
            - (1.0 - alpha) * w_neg * (1.0 - t) * log_1mpt)

    # Vector partial sum: fold the tile's sublane groups into the resident
    # (8,128) accumulator with plain VPU adds (no per-step cross-lane reduce).
    tr = loss.shape[0]
    acc_ref[...] += loss.reshape(tr // 8, 8, LANES).sum(axis=0)

    @pl.when(i == pl.num_programs(1) - 1)
    def _():
        out_ref[...] = acc_ref[...].reshape(1, 8, LANES)


def bce_focal_loss(predict, target, gamma=GAMMA, alpha=ALPHA):
    """reduction='sum' BCE focal loss. Returns a float32 scalar."""
    p_flat = predict.reshape(-1)
    t_flat = target.reshape(-1)
    n = p_flat.shape[0]

    rows_needed = max(_cdiv(n, LANES), 1)
    tile_rows = min(MAX_TILE_ROWS, _cdiv(rows_needed, 8) * 8)
    num_tiles = _cdiv(rows_needed, tile_rows)
    num_chunks = 2 if num_tiles >= 2 else 1          # feed both TCs on v7x
    num_tiles = _cdiv(num_tiles, num_chunks) * num_chunks
    tiles_per_chunk = num_tiles // num_chunks
    rows = num_tiles * tile_rows
    pad = rows * LANES - n

    if pad:  # only pay the pad copy when the shape actually needs it
        # (logit=+30, target=1) contributes exactly 0 to the loss: 1-pt == 0
        # kills the positive term and (1-t) == 0 kills the negative term.
        p_flat = jnp.pad(p_flat, (0, pad), constant_values=PAD_LOGIT)
        t_flat = jnp.pad(t_flat, (0, pad), constant_values=1)

    p2 = p_flat.reshape(rows, LANES)
    t2 = t_flat.reshape(rows, LANES)

    kernel = functools.partial(_focal_loss_kernel, gamma=gamma, alpha=alpha)

    def in_idx(c, i):
        return (c * tiles_per_chunk + i, 0)

    partials = pl.pallas_call(
        kernel,
        out_shape=jax.ShapeDtypeStruct((num_chunks, 8, LANES), jnp.float32),
        grid_spec=pltpu.PrefetchScalarGridSpec(
            num_scalar_prefetch=0,
            grid=(num_chunks, tiles_per_chunk),
            in_specs=[
                pl.BlockSpec((tile_rows, LANES), in_idx),
                pl.BlockSpec((tile_rows, LANES), in_idx),
            ],
            out_specs=pl.BlockSpec((1, 8, LANES), lambda c, i: (c, 0, 0)),
            scratch_shapes=[pltpu.VMEM((8, LANES), jnp.float32)],
        ),
        compiler_params=pltpu.CompilerParams(
            dimension_semantics=("parallel", "arbitrary")),
    )(p2, t2)

    # Tiny final reduction (num_chunks x 8 x 128) done outside the kernel.
    return jnp.sum(partials)


def bce_focal_loss_ref(predict, target, gamma=GAMMA, alpha=ALPHA):
    pt = jax.nn.sigmoid(predict.astype(jnp.float32))
    t = target.astype(jnp.float32)
    loss = (-alpha * (1 - pt) ** gamma * t * jnp.log(pt)
            - (1 - alpha) * pt ** gamma * (1 - t) * jnp.log(1 - pt))
    return jnp.sum(loss)


if __name__ == "__main__":
    key = jax.random.PRNGKey(0)
    k1, k2 = jax.random.split(key)
    # Small logits-like inputs consistent with a segmentation/detection head.
    predict = jax.random.normal(k1, (2, 4, 16, 16), dtype=jnp.float32)  # NCHW logits
    target = (jax.random.uniform(k2, (2, 4, 16, 16)) > 0.5).astype(jnp.float32)

    out = jax.block_until_ready(bce_focal_loss(predict, target))
    ref = jax.block_until_ready(bce_focal_loss_ref(predict, target))

    assert jnp.allclose(out, ref, rtol=1e-5, atol=1e-4), (out, ref)
    print("KERNEL_OK")
</pallas_src>

<mosaic_0001>
module attributes {stable_mosaic.version = 11 : i64} {
  func.func @_focal_loss_kernel(%arg0: i32, %arg1: i32, %arg2: memref<16x128xf32, #tpu.memory_space<vmem>>, %arg3: memref<16x128xf32, #tpu.memory_space<vmem>>, %arg4: memref<1x8x128xf32, #tpu.memory_space<vmem>>, %arg5: memref<8x128xf32, #tpu.memory_space<vmem>>) attributes {dimension_semantics = [#tpu.dimension_semantics<parallel>, #tpu.dimension_semantics<arbitrary>], iteration_bounds = array<i64: 1, 1>, scalar_prefetch = 0 : i64, scratch_operands = 1 : i64, tpu.core_type = #tpu.core_type<tc>, window_params = [{transform_indices = @transform_0, window_bounds = array<i64: 16, 128>}, {transform_indices = @transform_1, window_bounds = array<i64: 16, 128>}, {transform_indices = @transform_2, window_bounds = array<i64: 1, 8, 128>}]} {
    %c0_i32 = arith.constant 0 : i32
    %0 = arith.cmpi eq, %arg1, %c0_i32 : i32
    %1 = arith.extui %0 : i1 to i32
    %c0_i32_0 = arith.constant 0 : i32
    %2 = arith.cmpi ne, %1, %c0_i32_0 : i32
    scf.if %2 {
      %cst_21 = arith.constant 0.000000e+00 : f32
      %49 = vector.broadcast %cst_21 : f32 to vector<8x128xf32>
      %c0_22 = arith.constant 0 : index
      %c0_23 = arith.constant 0 : index
      %50 = vector.load %arg5[%c0_22, %c0_23] : memref<8x128xf32, #tpu.memory_space<vmem>>, vector<8x128xf32>
      tpu.vector_store %arg5[%c0_22, %c0_23], %49 {strides = array<i32>} : memref<8x128xf32, #tpu.memory_space<vmem>>, vector<8x128xf32>,
    } else {
    }
    %c0 = arith.constant 0 : index
    %c0_1 = arith.constant 0 : index
    %3 = vector.load %arg2[%c0, %c0_1] : memref<16x128xf32, #tpu.memory_space<vmem>>, vector<16x128xf32>
    %c0_2 = arith.constant 0 : index
    %c0_3 = arith.constant 0 : index
    %4 = vector.load %arg3[%c0_2, %c0_3] : memref<16x128xf32, #tpu.memory_space<vmem>>, vector<16x128xf32>
    %5 = math.absf %3 : vector<16x128xf32>
    %cst = arith.constant 0.000000e+00 : f32
    %6 = vector.broadcast %cst : f32 to vector<16x128xf32>
    %7 = arith.subf %6, %5 : vector<16x128xf32>
    %8 = math.exp %7 : vector<16x128xf32>
    %cst_4 = arith.constant 1.000000e+00 : f32
    %9 = vector.broadcast %cst_4 : f32 to vector<16x128xf32>
    %10 = arith.addf %9, %8 : vector<16x128xf32>
    %11 = math.log %10 : vector<16x128xf32>
    %cst_5 = arith.constant 0.000000e+00 : f32
    %12 = vector.broadcast %cst_5 : f32 to vector<16x128xf32>
    %13 = arith.minimumf %3, %12 : vector<16x128xf32>
    %14 = arith.subf %13, %11 : vector<16x128xf32>
    %cst_6 = arith.constant 0.000000e+00 : f32
    %15 = vector.broadcast %cst_6 : f32 to vector<16x128xf32>
    %16 = arith.subf %15, %3 : vector<16x128xf32>
    %cst_7 = arith.constant 0.000000e+00 : f32
    %17 = vector.broadcast %cst_7 : f32 to vector<16x128xf32>
    %18 = arith.minimumf %16, %17 : vector<16x128xf32>
    %19 = arith.subf %18, %11 : vector<16x128xf32>
    %cst_8 = arith.constant 1.000000e+00 : f32
    %20 = vector.broadcast %cst_8 : f32 to vector<16x128xf32>
    %21 = arith.divf %20, %10 : vector<16x128xf32>
    %cst_9 = arith.constant 0.000000e+00 : f32
    %22 = vector.broadcast %cst_9 : f32 to vector<16x128xf32>
    %23 = arith.cmpf oge, %3, %22 : vector<16x128xf32>
    %24 = arith.mulf %8, %21 : vector<16x128xf32>
    %25 = arith.select %23, %21, %24 : vector<16x128xi1>, vector<16x128xf32>
    %cst_10 = arith.constant 1.000000e+00 : f32
    %26 = vector.broadcast %cst_10 : f32 to vector<16x128xf32>
    %27 = arith.subf %26, %25 : vector<16x128xf32>
    %28 = arith.mulf %27, %27 : vector<16x128xf32>
    %29 = arith.mulf %25, %25 : vector<16x128xf32>
    %cst_11 = arith.constant -0.949999988 : f32
    %30 = vector.broadcast %cst_11 : f32 to vector<16x128xf32>
    %31 = arith.mulf %30, %28 : vector<16x128xf32>
    %32 = arith.mulf %31, %4 : vector<16x128xf32>
    %33 = arith.mulf %32, %14 : vector<16x128xf32>
    %cst_12 = arith.constant 5.000000e-02 : f32
    %34 = vector.broadcast %cst_12 : f32 to vector<16x128xf32>
    %35 = arith.mulf %34, %29 : vector<16x128xf32>
    %cst_13 = arith.constant 1.000000e+00 : f32
    %36 = vector.broadcast %cst_13 : f32 to vector<16x128xf32>
    %37 = arith.subf %36, %4 : vector<16x128xf32>
    %38 = arith.mulf %35, %37 : vector<16x128xf32>
    %39 = arith.mulf %38, %19 : vector<16x128xf32>
    %40 = arith.subf %33, %39 : vector<16x128xf32>
    %c0_14 = arith.constant 0 : index
    %c0_15 = arith.constant 0 : index
    %41 = vector.load %arg5[%c0_14, %c0_15] : memref<8x128xf32, #tpu.memory_space<vmem>>, vector<8x128xf32>
    %42 = vector.shape_cast %40 : vector<16x128xf32> to vector<2x8x128xf32>
    %cst_16 = arith.constant dense<0.000000e+00> : vector<8x128xf32>
    %43 = vector.multi_reduction <add>, %42, %cst_16 [0] : vector<2x8x128xf32> to vector<8x128xf32>
    %44 = arith.addf %41, %43 : vector<8x128xf32>
    %c0_17 = arith.constant 0 : index
    %c0_18 = arith.constant 0 : index
    %45 = vector.load %arg5[%c0_17, %c0_18] : memref<8x128xf32, #tpu.memory_space<vmem>>, vector<8x128xf32>
    tpu.vector_store %arg5[%c0_17, %c0_18], %44 {strides = array<i32>} : memref<8x128xf32, #tpu.memory_space<vmem>>, vector<8x128xf32>,
    %c0_i32_19 = arith.constant 0 : i32
    %46 = arith.cmpi eq, %arg1, %c0_i32_19 : i32
    %47 = arith.extui %46 : i1 to i32
    %c0_i32_20 = arith.constant 0 : i32
    %48 = arith.cmpi ne, %47, %c0_i32_20 : i32
    scf.if %48 {
      %c0_21 = arith.constant 0 : index
      %c0_22 = arith.constant 0 : index
      %49 = vector.load %arg5[%c0_21, %c0_22] : memref<8x128xf32, #tpu.memory_space<vmem>>, vector<8x128xf32>
      %50 = vector.shape_cast %49 : vector<8x128xf32> to vector<1x8x128xf32>
      %c0_23 = arith.constant 0 : index
      %c0_24 = arith.constant 0 : index
      %c0_25 = arith.constant 0 : index
      %51 = vector.load %arg4[%c0_23, %c0_24, %c0_25] : memref<1x8x128xf32, #tpu.memory_space<vmem>>, vector<1x8x128xf32>
      tpu.vector_store %arg4[%c0_23, %c0_24, %c0_25], %50 {strides = array<i32>} : memref<1x8x128xf32, #tpu.memory_space<vmem>>, vector<1x8x128xf32>,
    } else {
    }
    return
  }
  func.func @transform_0(%arg0: i32, %arg1: i32) -> (i32, i32) {
    %c1_i32 = arith.constant 1 : i32
    %0 = arith.muli %arg0, %c1_i32 : i32
    %1 = arith.addi %0, %arg1 : i32
    %c0_i32 = arith.constant 0 : i32
    %c0_i32_0 = arith.constant 0 : i32
    return %1, %c0_i32 : i32, i32
  }
  func.func @transform_1(%arg0: i32, %arg1: i32) -> (i32, i32) {
    %c1_i32 = arith.constant 1 : i32
    %0 = arith.muli %arg0, %c1_i32 : i32
    %1 = arith.addi %0, %arg1 : i32
    %c0_i32 = arith.constant 0 : i32
    %c0_i32_0 = arith.constant 0 : i32
    return %1, %c0_i32 : i32, i32
  }
  func.func @transform_2(%arg0: i32, %arg1: i32) -> (i32, i32, i32) {
    %c0_i32 = arith.constant 0 : i32
    %c0_i32_0 = arith.constant 0 : i32
    %c0_i32_1 = arith.constant 0 : i32
    return %arg0, %c0_i32, %c0_i32_0 : i32, i32, i32
  }
}

</mosaic_0001>

<llo_original>
// kernel: tpu_custom_call.1
$region0: #{tpu_custom_call.1}
  #allocation0 [shape = 'u32[]', space=smem, size = 0x4, offset = 0x4, fixed_abs, tag = 'smem constant byte address 0x4 - core index']
  #allocation1 [shape = 'u32[144,128]{1,0:T(1,128)}', space=vmem, size = 0x12000, scoped, tag = 'internal scratch']
  #allocation2 [shape = 'f32[8,128]{1,0:T(8,128)}', space=vmem, size = 0x1000, scoped, tag = 'scratch operand']
  %s0 = inlined_call_operand.hbm [shape: f32[16,128], index: 0, kind: input, shape index: {}]
  %s1 = inlined_call_operand.hbm [shape: f32[16,128], index: 1, kind: input, shape index: {}]
  %s2 = inlined_call_operand.hbm [shape: f32[1,8,128], index: 2, kind: output, shape index: {}]
  %s3 = sld [smem:[#allocation0]]
  $region34: #{tpu_custom_call.1} parent=0
    _
  %s5 = ssub.s32 1, %s3
  %s6 = scalar_select 0, %s5, %s3
  $region1: #{tpu_custom_call.1} parent=0
    #allocation3 [shape = 'u8[8192]{0}', space=vmem, size = 0x2000, scoped, tag = 'input window, operand 0, single buffered']
    #allocation4 [shape = 's32[1]{0}', space=sflag, size = 0x4, scoped, tag = 'scoped memory for tpu_custom_call.1']
    #allocation5 [shape = 's32[1]{0}', space=sflag, size = 0x4, scoped, tag = 'scoped memory for tpu_custom_call.1']
    #allocation6 [shape = 'u8[8192]{0}', space=vmem, size = 0x2000, scoped, tag = 'input window, operand 1, single buffered']
    #allocation7 [shape = 's32[1]{0}', space=sflag, size = 0x4, scoped, tag = 'scoped memory for tpu_custom_call.1']
    #allocation8 [shape = 'u8[4096]{0}', space=vmem, size = 0x1000, scoped, tag = 'output window, operand 0, single buffered']
    %7 = vsyncpa [#allocation4], 0
    %8 = vsyncpa [#allocation7], 0
    %9 = vsyncpa [#allocation5], 0
    // Predicated region
    $region2: #{tpu_custom_call.1} parent=1 // pred_check
      _
    $region3: #{tpu_custom_call.1} parent=1 // pred_check_branch
      %11 = sbr.rel (0) target = $region5
    $region4: #{tpu_custom_call.1} parent=1 // pred_region
      %s12 = sadd.s32 0, 0
      %s13 = smul.u32 2, %s12
      %s15 = ssub.s32 256, 256
      %16 = vsyncadd [#allocation4], %s15
      %s17 = smul.addr %s13, 128
      %s18 = scalar_lea.hbm %s0, %s17
      %s19 = sshll.u32 [#allocation3], 4
      %s20 = int_to_ptr.vmem [resolvable:$true] %s19
      %25 = dma.hbm_to_vmem [thread:$0]  %s18, 256, %s20, [#allocation4], 128, 128, 8
    $region5: #{tpu_custom_call.1} parent=1 // pred_fallthru
      _
    // Predicated region
    $region6: #{tpu_custom_call.1} parent=1 // pred_check
      _
    $region7: #{tpu_custom_call.1} parent=1 // pred_check_branch
      %27 = sbr.rel (0) target = $region9
    $region8: #{tpu_custom_call.1} parent=1 // pred_region
      %s28 = sadd.s32 0, 0
      %s29 = smul.u32 2, %s28
      %s31 = ssub.s32 256, 256
      %32 = vsyncadd [#allocation7], %s31
      %s33 = smul.addr %s29, 128
      %s34 = scalar_lea.hbm %s1, %s33
      %s35 = sshll.u32 [#allocation6], 4
      %s36 = int_to_ptr.vmem [resolvable:$true] %s35
      %41 = dma.hbm_to_vmem [thread:$0]  %s34, 256, %s36, [#allocation7], 128, 128, 8
    $region9: #{tpu_custom_call.1} parent=1 // pred_fallthru
      _
    // Predicated region
    $region10: #{tpu_custom_call.1} parent=1 // pred_check
      _
    $region11: #{tpu_custom_call.1} parent=1 // pred_check_branch
      %43 = sbr.rel (0) target = $region13
    $region12: #{tpu_custom_call.1} parent=1 // pred_region
      %44 = dma.done [#allocation4], 256
    $region13: #{tpu_custom_call.1} parent=1 // pred_fallthru
      _
    // Predicated region
    $region14: #{tpu_custom_call.1} parent=1 // pred_check
      _
    $region15: #{tpu_custom_call.1} parent=1 // pred_check_branch
      %46 = sbr.rel (0) target = $region17
    $region16: #{tpu_custom_call.1} parent=1 // pred_region
      %47 = dma.done [#allocation7], 256
    $region17: #{tpu_custom_call.1} parent=1 // pred_fallthru
      _
    %s48 = sadd.s32 0, 0
    %s49 = smul.u32 2, %s48
    %s50 = sadd.s32 0, 0
    %s51 = smul.u32 2, %s50
    %p52 = scmp.eq.s32.totalorder 0, 0
    // Predicated region
    $region18: #{tpu_custom_call.1} parent=1 // pred_check
      %p53 = pneg %p52
    $region19: #{tpu_custom_call.1} parent=1 // pred_check_branch
      %55 = sbr.rel (%p53) target = $region21
    $region20: #{tpu_custom_call.1} parent=1 // pred_region
      %56 = vst [vmem:[#allocation2] sm:$0xff] 0.0
    $region21: #{tpu_custom_call.1} parent=1 // pred_fallthru
      _
    %v57 = vld [vmem:[#allocation3] sm:$0xff]
    %v58 = vld [vmem:[#allocation3 + $0x8] sm:$0xff]
    %v59 = vld [vmem:[#allocation6] sm:$0xff]
    %v60 = vld [vmem:[#allocation6 + $0x8] sm:$0xff]
    %v61 = vand.u32 2147483647, %v57
    %v62 = vand.u32 2147483647, %v58
    %v63 = vsub.f32 0.0, %v61
    %v64 = vsub.f32 0.0, %v62
    %v65 = vmul.f32 %v63, 1.442695
    %v66 = vpow.pop %v65
    %v67 = vmul.f32 %v64, 1.442695
    %v68 = vpow.pop %v67
    %v69 = vadd.f32 %v66, 1.0
    %v70 = vadd.f32 %v68, 1.0
    %v71 = vlog2.pop %v69
    %v72 = vmul.f32 %v71, 0.6931472
    %v73 = vlog2.pop %v70
    %v74 = vmul.f32 %v73, 0.6931472
    %v75 = vmin.f32 %v57, 0.0
    %v76 = vmin.f32 %v58, 0.0
    %v77 = vsub.f32 %v75, %v72
    %v78 = vsub.f32 %v76, %v74
    %v79 = vsub.f32 0.0, %v57
    %v80 = vsub.f32 0.0, %v58
    %v81 = vmin.f32 %v79, 0.0
    %v82 = vmin.f32 %v80, 0.0
    %v83 = vsub.f32 %v81, %v72
    %v84 = vsub.f32 %v82, %v74
    %v85 = vrcp.pop %v69
    %v86 = vmul.f32 1.0, %v85
    %v87 = vrcp.pop %v70
    %v88 = vmul.f32 1.0, %v87
    %vm89 = vcmp.ge.f32.partialorder %v57, 0.0
    %vm90 = vcmp.ge.f32.partialorder %v58, 0.0
    %v91 = vmul.f32 %v66, %v86
    %v92 = vmul.f32 %v68, %v88
    %v93 = vsel %vm89, %v86, %v91
    %v94 = vsel %vm90, %v88, %v92
    %v95 = vsub.f32 1.0, %v93
    %v96 = vsub.f32 1.0, %v94
    %v97 = vmul.f32 %v95, %v95
    %v98 = vmul.f32 %v96, %v96
    %v99 = vmul.f32 %v93, %v93
    %v100 = vmul.f32 %v94, %v94
    %v101 = vmul.f32 %v97, -0.95
    %v102 = vmul.f32 %v98, -0.95
    %v103 = vmul.f32 %v101, %v59
    %v104 = vmul.f32 %v102, %v60
    %v105 = vmul.f32 %v103, %v77
    %v106 = vmul.f32 %v104, %v78
    %v107 = vmul.f32 %v99, 0.05
    %v108 = vmul.f32 %v100, 0.05
    %v109 = vsub.f32 1.0, %v59
    %v110 = vsub.f32 1.0, %v60
    %v111 = vmul.f32 %v107, %v109
    %v112 = vmul.f32 %v108, %v110
    %v113 = vmul.f32 %v111, %v83
    %v114 = vmul.f32 %v112, %v84
    %v115 = vsub.f32 %v105, %v113
    %v116 = vsub.f32 %v106, %v114
    %v117 = vld [vmem:[#allocation2] sm:$0xff]
    %v118 = vadd.f32 %v115, %v116
    %v119 = vadd.f32 %v117, %v118
    %120 = vst [vmem:[#allocation2] sm:$0xff] %v119
    // Predicated region
    $region22: #{tpu_custom_call.1} parent=1 // pred_check
      %p121 = pneg %p52
    $region23: #{tpu_custom_call.1} parent=1 // pred_check_branch
      %123 = sbr.rel (%p121) target = $region25
    $region24: #{tpu_custom_call.1} parent=1 // pred_region
      %v124 = vld [vmem:[#allocation2] sm:$0xff]
      %125 = vst [vmem:[#allocation8] sm:$0xff] %v124
    $region25: #{tpu_custom_call.1} parent=1 // pred_fallthru
      _
    // Predicated region
    $region26: #{tpu_custom_call.1} parent=1 // pred_check
      _
    $region27: #{tpu_custom_call.1} parent=1 // pred_check_branch
      %127 = sbr.rel (0) target = $region29
    $region28: #{tpu_custom_call.1} parent=1 // pred_region
      %s129 = ssub.s32 128, 128
      %130 = vsyncadd [#allocation5], %s129
      %s132 = sshll.u32 [#allocation8], 4
      %s133 = int_to_ptr.vmem [resolvable:$true] %s132
      %135 = dma.vmem_to_hbm [thread:$0]  %s133, 128, %s2, [#allocation5]
    $region29: #{tpu_custom_call.1} parent=1 // pred_fallthru
      _
    // Predicated region
    $region30: #{tpu_custom_call.1} parent=1 // pred_check
      _
    $region31: #{tpu_custom_call.1} parent=1 // pred_check_branch
      %137 = sbr.rel (0) target = $region33
    $region32: #{tpu_custom_call.1} parent=1 // pred_region
      %138 = dma.done [#allocation5], 128
    $region33: #{tpu_custom_call.1} parent=1 // pred_fallthru
      _
    %139 = vsyncpa [#allocation4], 1
    %140 = vsyncpa [#allocation7], 1
    %141 = vsyncpa [#allocation5], 1

</llo_original>
